<compile_context>
chip_gen: v5e
topology: v5e:2x2
jax: 0.10.0
libtpu: 0.0.40
codegen_flags: <defaults>
</compile_context>

<pallas_src>
import jax
import jax.numpy as jnp
from jax.experimental import pallas as pl
from jax.experimental.pallas import tpu as pltpu


def _round_up(x: int, m: int) -> int:
    return ((x + m - 1) // m) * m


def _cdiv(a: int, b: int) -> int:
    return -(-a // b)


def _make_mlp_kernel(num_layers: int):
    """Build a feature-major MLP kernel for `num_layers` Linear layers.

    Ref order: (x_t, w1, b1, w2, b2, ..., wN, bN, out).
    All activations are (features, batch_tile): batch fills the 128-lane axis.
    """

    def kernel(*refs):
        xt_ref = refs[0]
        out_ref = refs[-1]
        h = xt_ref[...]
        for layer in range(num_layers):
            w_ref = refs[1 + 2 * layer]
            b_ref = refs[2 + 2 * layer]
            # (out_f, in_f) @ (in_f, tb) -> (out_f, tb) on the MXU, f32 accumulate.
            h = jnp.dot(w_ref[...], h, preferred_element_type=jnp.float32)
            h = h + b_ref[...]          # (out_f, 1) broadcast along lanes
            if layer < num_layers - 1:  # ReLU on hidden layers only
                h = jnp.maximum(h, 0.0)
        out_ref[...] = h.astype(out_ref.dtype)

    return kernel


def _choose_batch_tile(batch: int, row_bytes: int, *, max_tile: int = 32768):
    """Pick a 128-aligned batch tile and tile count.

    Targets: tile large enough to amortize per-step overhead, >=2 tiles for v7x's
    two TensorCores (when batch > 128), tail padding < 128 rows per tile, and a
    footprint comfortably inside every chip's scoped-VMEM budget.
    """
    LANE = 128
    vmem_budget = 24 * 1024 * 1024  # leave headroom below the 32 MiB limit we set
    cap = max(LANE, (vmem_budget // max(row_bytes, 1)) // LANE * LANE)
    max_tile = max(LANE, min(max_tile, cap))

    if batch <= LANE:
        num_tiles = 1
    else:
        num_tiles = max(2, _cdiv(batch, max_tile))
    tile = _round_up(_cdiv(batch, num_tiles), LANE)
    tile = min(tile, max_tile) if tile > LANE else tile
    tile = max(tile, LANE)
    num_tiles = _cdiv(batch, tile)
    return tile, num_tiles


def vanilla_value_network_forward(x, params, *, max_block_batch: int = 32768):
    """x: (B, input_dim) float32.  params: list of (w, b) with w:(out_f,in_f), b:(out_f,1)."""
    layers = list(params)
    num_layers = len(layers)
    B, in_dim = x.shape
    out_dim = layers[-1][0].shape[0]
    hidden_sum = sum(int(w.shape[0]) for w, _ in layers[:-1])

    # Rough live f32 bytes per batch row: double-buffered x + out tiles plus the
    # feature-major intermediates the compiler keeps live during compute.
    row_bytes = 4 * (2 * in_dim + 2 * out_dim + 2 * max(hidden_sum, 1))
    tb, num_tiles = _choose_batch_tile(B, row_bytes, max_tile=max_block_batch)
    b_padded = tb * num_tiles

    # Feature-major input: (in_dim, B_padded); batch on the 128-lane axis.
    # The transpose is the single wrapper-side copy; the tail pad fuses into it.
    x_t = jnp.transpose(x)
    if b_padded != B:
        x_t = jnp.pad(x_t, ((0, 0), (0, b_padded - B)))

    def resident(shape):
        # Constant block index -> DMA'd once, stays VMEM-resident across grid steps.
        return pl.BlockSpec(shape, lambda i: (0, 0))

    in_specs = [pl.BlockSpec((in_dim, tb), lambda i: (0, i))]
    operands = [x_t]
    for w, b in layers:
        in_specs.append(resident(w.shape))
        in_specs.append(resident(b.shape))
        operands.append(w)
        operands.append(b)

    out_t = pl.pallas_call(
        _make_mlp_kernel(num_layers),
        out_shape=jax.ShapeDtypeStruct((out_dim, b_padded), jnp.float32),
        grid=(num_tiles,),
        in_specs=in_specs,
        out_specs=pl.BlockSpec((out_dim, tb), lambda i: (0, i)),
        compiler_params=pltpu.CompilerParams(
            # Batch tiles are independent -> shard across v7x's 2 TCs; neutral on v5e/v6e.
            dimension_semantics=("parallel",),
            # Explicit budget: > v5e's 16 MiB scoped default, < v7x's 64 MiB physical.
            vmem_limit_bytes=32 * 1024 * 1024,
        ),
    )(*operands)

    # Back to the module's (B, out_dim) layout; padded tail columns are discarded.
    return jnp.transpose(out_t[:, :B])


def init_params(key, input_dim, hidden_dims, output_dim):
    """Xavier-normal weights (PyTorch (out_features, in_features) layout), small biases.

    Biases are stored as (out_features, 1) columns for the feature-major kernel."""
    dims = [input_dim] + list(hidden_dims or []) + [output_dim]
    layers = []
    for d_in, d_out in zip(dims[:-1], dims[1:]):
        key, wk, bk = jax.random.split(key, 3)
        std = (2.0 / (d_in + d_out)) ** 0.5  # xavier_normal, gain=1
        w = jax.random.normal(wk, (d_out, d_in), dtype=jnp.float32) * std
        b = jax.random.normal(bk, (d_out, 1), dtype=jnp.float32) * 0.01
        layers.append((w, b))
    return layers


def reference_forward(x, params):
    h = x
    n = len(params)
    for i, (w, b) in enumerate(params):
        h = h @ w.T + b.reshape(1, -1)
        if i < n - 1:
            h = jnp.maximum(h, 0.0)
    return h


if __name__ == "__main__":
    key = jax.random.PRNGKey(0)
    input_dim, hidden_dims, output_dim = 16, [32, 32], 1
    kx1, kx2, kp = jax.random.split(key, 3)
    params = init_params(kp, input_dim, hidden_dims, output_dim)

    # Case 1: tiny batch (single tile).
    batch1 = 8
    x1 = jax.random.normal(kx1, (batch1, input_dim), dtype=jnp.float32)
    out1 = jax.block_until_ready(vanilla_value_network_forward(x1, params))
    ref1 = reference_forward(x1, params)
    assert out1.shape == (batch1, output_dim)
    assert jnp.allclose(out1, ref1, atol=1e-4, rtol=1e-4), "mismatch vs reference (B=8)"

    # Case 2: multi-tile grid (>=2 tiles) with a ragged, padded tail.
    batch2 = 200
    x2 = jax.random.normal(kx2, (batch2, input_dim), dtype=jnp.float32)
    out2 = jax.block_until_ready(vanilla_value_network_forward(x2, params))
    ref2 = reference_forward(x2, params)
    assert out2.shape == (batch2, output_dim)
    assert jnp.allclose(out2, ref2, atol=1e-4, rtol=1e-4), "mismatch vs reference (B=200)"

    print("KERNEL_OK")
</pallas_src>

<mosaic_0001>
module attributes {stable_mosaic.version = 11 : i64} {
  func.func @kernel(%arg0: i32, %arg1: memref<16x128xf32, #tpu.memory_space<vmem>>, %arg2: memref<32x16xf32, #tpu.memory_space<vmem>>, %arg3: memref<32x1xf32, #tpu.memory_space<vmem>>, %arg4: memref<32x32xf32, #tpu.memory_space<vmem>>, %arg5: memref<32x1xf32, #tpu.memory_space<vmem>>, %arg6: memref<1x32xf32, #tpu.memory_space<vmem>>, %arg7: memref<1x1xf32, #tpu.memory_space<vmem>>, %arg8: memref<1x128xf32, #tpu.memory_space<vmem>>) attributes {dimension_semantics = [#tpu.dimension_semantics<parallel>], iteration_bounds = array<i64: 1>, scalar_prefetch = 0 : i64, scratch_operands = 0 : i64, tpu.core_type = #tpu.core_type<tc>, window_params = [{transform_indices = @transform_0, window_bounds = array<i64: 16, 128>}, {pipeline_mode = #tpu.pipeline_mode<synchronous>, transform_indices = @transform_1, window_bounds = array<i64: 32, 16>}, {pipeline_mode = #tpu.pipeline_mode<synchronous>, transform_indices = @transform_2, window_bounds = array<i64: 32, 1>}, {pipeline_mode = #tpu.pipeline_mode<synchronous>, transform_indices = @transform_3, window_bounds = array<i64: 32, 32>}, {pipeline_mode = #tpu.pipeline_mode<synchronous>, transform_indices = @transform_4, window_bounds = array<i64: 32, 1>}, {pipeline_mode = #tpu.pipeline_mode<synchronous>, transform_indices = @transform_5, window_bounds = array<i64: 1, 32>}, {pipeline_mode = #tpu.pipeline_mode<synchronous>, transform_indices = @transform_6, window_bounds = array<i64: 1, 1>}, {transform_indices = @transform_7, window_bounds = array<i64: 1, 128>}]} {
    %c0 = arith.constant 0 : index
    %c0_0 = arith.constant 0 : index
    %0 = vector.load %arg1[%c0, %c0_0] : memref<16x128xf32, #tpu.memory_space<vmem>>, vector<16x128xf32>
    %c0_1 = arith.constant 0 : index
    %c0_2 = arith.constant 0 : index
    %1 = vector.load %arg2[%c0_1, %c0_2] : memref<32x16xf32, #tpu.memory_space<vmem>>, vector<32x16xf32>
    %cst = arith.constant dense<0.000000e+00> : vector<32x128xf32>
    %2 = tpu.matmul %1, %0, %cst {dimension_numbers = #tpu.dot_dimension_numbers<[1], [0], [0], [1], [0, 0, 1, 1], [], []>} : vector<32x16xf32>, vector<16x128xf32>, vector<32x128xf32> -> vector<32x128xf32>
    %c0_3 = arith.constant 0 : index
    %c0_4 = arith.constant 0 : index
    %3 = vector.load %arg3[%c0_3, %c0_4] : memref<32x1xf32, #tpu.memory_space<vmem>>, vector<32x1xf32>
    %4 = vector.broadcast %3 : vector<32x1xf32> to vector<32x128xf32>
    %5 = arith.addf %2, %4 : vector<32x128xf32>
    %cst_5 = arith.constant 0.000000e+00 : f32
    %6 = vector.broadcast %cst_5 : f32 to vector<32x128xf32>
    %7 = arith.maximumf %5, %6 : vector<32x128xf32>
    %c0_6 = arith.constant 0 : index
    %c0_7 = arith.constant 0 : index
    %8 = vector.load %arg4[%c0_6, %c0_7] : memref<32x32xf32, #tpu.memory_space<vmem>>, vector<32x32xf32>
    %cst_8 = arith.constant dense<0.000000e+00> : vector<32x128xf32>
    %9 = tpu.matmul %8, %7, %cst_8 {dimension_numbers = #tpu.dot_dimension_numbers<[1], [0], [0], [1], [0, 0, 1, 1], [], []>} : vector<32x32xf32>, vector<32x128xf32>, vector<32x128xf32> -> vector<32x128xf32>
    %c0_9 = arith.constant 0 : index
    %c0_10 = arith.constant 0 : index
    %10 = vector.load %arg5[%c0_9, %c0_10] : memref<32x1xf32, #tpu.memory_space<vmem>>, vector<32x1xf32>
    %11 = vector.broadcast %10 : vector<32x1xf32> to vector<32x128xf32>
    %12 = arith.addf %9, %11 : vector<32x128xf32>
    %cst_11 = arith.constant 0.000000e+00 : f32
    %13 = vector.broadcast %cst_11 : f32 to vector<32x128xf32>
    %14 = arith.maximumf %12, %13 : vector<32x128xf32>
    %c0_12 = arith.constant 0 : index
    %c0_13 = arith.constant 0 : index
    %15 = vector.load %arg6[%c0_12, %c0_13] : memref<1x32xf32, #tpu.memory_space<vmem>>, vector<1x32xf32>
    %cst_14 = arith.constant dense<0.000000e+00> : vector<1x128xf32>
    %16 = tpu.matmul %15, %14, %cst_14 {dimension_numbers = #tpu.dot_dimension_numbers<[1], [0], [0], [1], [0, 0, 1, 1], [], []>} : vector<1x32xf32>, vector<32x128xf32>, vector<1x128xf32> -> vector<1x128xf32>
    %c0_15 = arith.constant 0 : index
    %c0_16 = arith.constant 0 : index
    %17 = vector.load %arg7[%c0_15, %c0_16] : memref<1x1xf32, #tpu.memory_space<vmem>>, vector<1x1xf32>
    %18 = vector.broadcast %17 : vector<1x1xf32> to vector<1x128xf32>
    %19 = arith.addf %16, %18 : vector<1x128xf32>
    %c0_17 = arith.constant 0 : index
    %c0_18 = arith.constant 0 : index
    %20 = vector.load %arg8[%c0_17, %c0_18] : memref<1x128xf32, #tpu.memory_space<vmem>>, vector<1x128xf32>
    tpu.vector_store %arg8[%c0_17, %c0_18], %19 {strides = array<i32>} : memref<1x128xf32, #tpu.memory_space<vmem>>, vector<1x128xf32>,
    return
  }
  func.func @transform_0(%arg0: i32) -> (i32, i32) {
    %c0_i32 = arith.constant 0 : i32
    %c0_i32_0 = arith.constant 0 : i32
    return %c0_i32, %arg0 : i32, i32
  }
  func.func @transform_1(%arg0: i32) -> (i32, i32) {
    %c0_i32 = arith.constant 0 : i32
    %c0_i32_0 = arith.constant 0 : i32
    %c0_i32_1 = arith.constant 0 : i32
    return %c0_i32, %c0_i32_0 : i32, i32
  }
  func.func @transform_2(%arg0: i32) -> (i32, i32) {
    %c0_i32 = arith.constant 0 : i32
    %c0_i32_0 = arith.constant 0 : i32
    %c0_i32_1 = arith.constant 0 : i32
    return %c0_i32, %c0_i32_0 : i32, i32
  }
  func.func @transform_3(%arg0: i32) -> (i32, i32) {
    %c0_i32 = arith.constant 0 : i32
    %c0_i32_0 = arith.constant 0 : i32
    %c0_i32_1 = arith.constant 0 : i32
    return %c0_i32, %c0_i32_0 : i32, i32
  }
  func.func @transform_4(%arg0: i32) -> (i32, i32) {
    %c0_i32 = arith.constant 0 : i32
    %c0_i32_0 = arith.constant 0 : i32
    %c0_i32_1 = arith.constant 0 : i32
    return %c0_i32, %c0_i32_0 : i32, i32
  }
  func.func @transform_5(%arg0: i32) -> (i32, i32) {
    %c0_i32 = arith.constant 0 : i32
    %c0_i32_0 = arith.constant 0 : i32
    %c0_i32_1 = arith.constant 0 : i32
    return %c0_i32, %c0_i32_0 : i32, i32
  }
  func.func @transform_6(%arg0: i32) -> (i32, i32) {
    %c0_i32 = arith.constant 0 : i32
    %c0_i32_0 = arith.constant 0 : i32
    %c0_i32_1 = arith.constant 0 : i32
    return %c0_i32, %c0_i32_0 : i32, i32
  }
  func.func @transform_7(%arg0: i32) -> (i32, i32) {
    %c0_i32 = arith.constant 0 : i32
    %c0_i32_0 = arith.constant 0 : i32
    return %c0_i32, %arg0 : i32, i32
  }
}

</mosaic_0001>

<llo_original>
// kernel: tpu_custom_call.1
$region0: #{tpu_custom_call.1}
  #allocation0 [shape = 'u32[]', space=smem, size = 0x4, offset = 0x4, fixed_abs, tag = 'smem constant byte address 0x4 - core index']
  #allocation1 [shape = 'u32[72,128]{1,0:T(1,128)}', space=vmem, size = 0x9000, scoped, tag = 'internal scratch']
  #allocation2 [shape = 'f32[1,1]{1,0:T(1,128)S(1)}', space=vmem, size = 0x200, scoped, tag = 'scoped memory for tpu_custom_call.1']
  %s0 = inlined_call_operand.vmem [shape: f32[16,128], index: 0, kind: input, shape index: {}]
  %s1 = inlined_call_operand.vmem [shape: f32[32,16], index: 1, kind: input, shape index: {}]
  %s2 = inlined_call_operand.vmem [shape: f32[32,1], index: 2, kind: input, shape index: {}]
  %s3 = inlined_call_operand.vmem [shape: f32[32,32], index: 3, kind: input, shape index: {}]
  %s4 = inlined_call_operand.vmem [shape: f32[32,1], index: 4, kind: input, shape index: {}]
  %s5 = inlined_call_operand.vmem [shape: f32[1,32], index: 5, kind: input, shape index: {}]
  %s6 = inlined_call_operand.<no memory space> [shape: f32[1,1], index: 6, kind: input, shape index: {}]
  %s7 = inlined_call_operand.hbm [shape: f32[1,128], index: 7, kind: output, shape index: {}]
  %s8 = sld [smem:[#allocation0]]
  $region38: #{tpu_custom_call.1} parent=0
    _
  %s10 = ssub.s32 1, %s8
  %s11 = scalar_select 0, %s10, %s8
  %v12 = vstv %s6
  %13 = vst [vmem:[#allocation2] sm:$0x1] %v12
  $region1: #{tpu_custom_call.1} parent=0
    #allocation3 [shape = 'u8[512]{0}', space=vmem, size = 0x400, scoped, tag = 'output window, operand 0, single buffered']
    #allocation4 [shape = 's32[1]{0}', space=sflag, size = 0x4, scoped, tag = 'scoped memory for tpu_custom_call.1']
    %14 = vsyncpa [#allocation4], 0
    // Predicated region
    $region2: #{tpu_custom_call.1} parent=1 // pred_check
      _
    $region3: #{tpu_custom_call.1} parent=1 // pred_check_branch
      %16 = sbr.rel (0) target = $region5
    $region4: #{tpu_custom_call.1} parent=1 // pred_region
      _
    $region5: #{tpu_custom_call.1} parent=1 // pred_fallthru
      _
    // Predicated region
    $region6: #{tpu_custom_call.1} parent=1 // pred_check
      _
    $region7: #{tpu_custom_call.1} parent=1 // pred_check_branch
      %18 = sbr.rel (0) target = $region9
    $region8: #{tpu_custom_call.1} parent=1 // pred_region
      _
    $region9: #{tpu_custom_call.1} parent=1 // pred_fallthru
      _
    // Predicated region
    $region10: #{tpu_custom_call.1} parent=1 // pred_check
      _
    $region11: #{tpu_custom_call.1} parent=1 // pred_check_branch
      %20 = sbr.rel (0) target = $region13
    $region12: #{tpu_custom_call.1} parent=1 // pred_region
      _
    $region13: #{tpu_custom_call.1} parent=1 // pred_fallthru
      _
    // Predicated region
    $region14: #{tpu_custom_call.1} parent=1 // pred_check
      _
    $region15: #{tpu_custom_call.1} parent=1 // pred_check_branch
      %22 = sbr.rel (0) target = $region17
    $region16: #{tpu_custom_call.1} parent=1 // pred_region
      _
    $region17: #{tpu_custom_call.1} parent=1 // pred_fallthru
      _
    // Predicated region
    $region18: #{tpu_custom_call.1} parent=1 // pred_check
      _
    $region19: #{tpu_custom_call.1} parent=1 // pred_check_branch
      %24 = sbr.rel (0) target = $region21
    $region20: #{tpu_custom_call.1} parent=1 // pred_region
      _
    $region21: #{tpu_custom_call.1} parent=1 // pred_fallthru
      _
    // Predicated region
    $region22: #{tpu_custom_call.1} parent=1 // pred_check
      _
    $region23: #{tpu_custom_call.1} parent=1 // pred_check_branch
      %26 = sbr.rel (0) target = $region25
    $region24: #{tpu_custom_call.1} parent=1 // pred_region
      _
    $region25: #{tpu_custom_call.1} parent=1 // pred_fallthru
      _
    // Predicated region
    $region26: #{tpu_custom_call.1} parent=1 // pred_check
      _
    $region27: #{tpu_custom_call.1} parent=1 // pred_check_branch
      %28 = sbr.rel (0) target = $region29
    $region28: #{tpu_custom_call.1} parent=1 // pred_region
      _
    $region29: #{tpu_custom_call.1} parent=1 // pred_fallthru
      _
    %v29 = vld [vmem:[%s0] sm:$0xff]
    %v30 = vld [vmem:[%s0 + $0x8] sm:$0xff]
    %v31 = vld [vmem:[%s1] sm:$0xff]
    %v32 = vld [vmem:[%s1 + $0x8] sm:$0xff]
    %v33 = vld [vmem:[%s1 + $0x10] sm:$0xff]
    %v34 = vld [vmem:[%s1 + $0x18] sm:$0xff]
    %v35 = vld [vmem:[%s2] sm:$0xff]
    %v36 = vld [vmem:[%s2 + $0x8] sm:$0xff]
    %v37 = vld [vmem:[%s2 + $0x10] sm:$0xff]
    %v38 = vld [vmem:[%s2 + $0x18] sm:$0xff]
    %40 = vset.pattern.permute.xlu0 0
    %41 = vperm.xlu0 %40, %v35
    %v42 = vpop.permute.xlu0 %41
    %45 = vset.pattern.permute.xlu0 0
    %46 = vperm.xlu0 %45, %v36
    %v47 = vpop.permute.xlu0 %46
    %50 = vset.pattern.permute.xlu0 0
    %51 = vperm.xlu0 %50, %v37
    %v52 = vpop.permute.xlu0 %51
    %55 = vset.pattern.permute.xlu0 0
    %56 = vperm.xlu0 %55, %v38
    %v57 = vpop.permute.xlu0 %56
    %vm59 = vcmask 130048
    %v61 = vsel %vm59, %v31, 0
    %v64 = vsel %vm59, %v32, 0
    %v67 = vsel %vm59, %v33, 0
    %v70 = vsel %vm59, %v34, 0
    %72 = vmatpush.msra.mxu0 0.0
    %73 = vmatpush.msra.mxu0 0.0
    %74 = vmatpush.msra.mxu0 0.0
    %75 = vmatpush.msra.mxu0 0.0
    %76 = vmatpush.msra.mxu0 0.0
    %77 = vmatpush.msra.mxu0 0.0
    %78 = vmatpush.msra.mxu0 0.0
    %79 = vmatpush.msra.mxu0 0.0
    %80 = vmatpush.msra.mxu0 0.0
    %81 = vmatpush.msra.mxu0 0.0
    %82 = vmatpush.msra.mxu0 0.0
    %83 = vmatpush.msra.mxu0 0.0
    %84 = vmatpush.msra.mxu0 0.0
    %85 = vmatpush.msra.mxu0 0.0
    %86 = vmatpush.msra.mxu0 %v30
    %87 = vmatpush.msra.mxu0 %v29
    %88 = vmatmul.f32.gmra.mxu0 %v61
    %v89 = vpop.f32.mrf.mxu0
    %v90 = vadd.f32 %v42, %v89
    %91 = vmatmul.f32.gmra.mxu0 %v64
    %v92 = vpop.f32.mrf.mxu0
    %v93 = vadd.f32 %v47, %v92
    %94 = vmatmul.f32.gmra.mxu0 %v67
    %v95 = vpop.f32.mrf.mxu0
    %v96 = vadd.f32 %v52, %v95
    %97 = vmatmul.f32.gmra.mxu0 %v70
    %v98 = vpop.f32.mrf.mxu0
    %v99 = vadd.f32 %v57, %v98
    %100 = vdwg.mxu0
    %v101 = vmax.f32 %v90, 0.0
    %v102 = vmax.f32 %v93, 0.0
    %v103 = vmax.f32 %v96, 0.0
    %v104 = vmax.f32 %v99, 0.0
    %v105 = vld [vmem:[%s3] sm:$0xff]
    %v106 = vld [vmem:[%s3 + $0x8] sm:$0xff]
    %v107 = vld [vmem:[%s3 + $0x10] sm:$0xff]
    %v108 = vld [vmem:[%s3 + $0x18] sm:$0xff]
    %v109 = vld [vmem:[%s4] sm:$0xff]
    %v110 = vld [vmem:[%s4 + $0x8] sm:$0xff]
    %v111 = vld [vmem:[%s4 + $0x10] sm:$0xff]
    %v112 = vld [vmem:[%s4 + $0x18] sm:$0xff]
    %114 = vset.pattern.permute.xlu0 0
    %115 = vperm.xlu0 %114, %v109
    %v116 = vpop.permute.xlu0 %115
    %119 = vset.pattern.permute.xlu0 0
    %120 = vperm.xlu0 %119, %v110
    %v121 = vpop.permute.xlu0 %120
    %124 = vset.pattern.permute.xlu0 0
    %125 = vperm.xlu0 %124, %v111
    %v126 = vpop.permute.xlu0 %125
    %129 = vset.pattern.permute.xlu0 0
    %130 = vperm.xlu0 %129, %v112
    %v131 = vpop.permute.xlu0 %130
    %vm133 = vcmask 261120
    %v135 = vsel %vm133, %v105, 0
    %v138 = vsel %vm133, %v106, 0
    %v141 = vsel %vm133, %v107, 0
    %v144 = vsel %vm133, %v108, 0
    %146 = vmatpush.msra.mxu0 0.0
    %147 = vmatpush.msra.mxu0 0.0
    %148 = vmatpush.msra.mxu0 0.0
    %149 = vmatpush.msra.mxu0 0.0
    %150 = vmatpush.msra.mxu0 0.0
    %151 = vmatpush.msra.mxu0 0.0
    %152 = vmatpush.msra.mxu0 0.0
    %153 = vmatpush.msra.mxu0 0.0
    %154 = vmatpush.msra.mxu0 0.0
    %155 = vmatpush.msra.mxu0 0.0
    %156 = vmatpush.msra.mxu0 0.0
    %157 = vmatpush.msra.mxu0 0.0
    %158 = vmatpush.msra.mxu0 %v104
    %159 = vmatpush.msra.mxu0 %v103
    %160 = vmatpush.msra.mxu0 %v102
    %161 = vmatpush.msra.mxu0 %v101
    %162 = vmatmul.f32.gmra.mxu0 %v135
    %v163 = vpop.f32.mrf.mxu0
    %v164 = vadd.f32 %v116, %v163
    %165 = vmatmul.f32.gmra.mxu0 %v138
    %v166 = vpop.f32.mrf.mxu0
    %v167 = vadd.f32 %v121, %v166
    %168 = vmatmul.f32.gmra.mxu0 %v141
    %v169 = vpop.f32.mrf.mxu0
    %v170 = vadd.f32 %v126, %v169
    %171 = vmatmul.f32.gmra.mxu0 %v144
    %v172 = vpop.f32.mrf.mxu0
    %v173 = vadd.f32 %v131, %v172
    %174 = vdwg.mxu0
    %v175 = vmax.f32 %v164, 0.0
    %v176 = vmax.f32 %v167, 0.0
    %v177 = vmax.f32 %v170, 0.0
    %v178 = vmax.f32 %v173, 0.0
    %v179 = vld [vmem:[%s5] sm:$0x1]
    %v180 = vld [vmem:[#allocation2] sm:$0x1]
    %182 = vset.pattern.permute.xlu0 0
    %183 = vperm.xlu0 %182, %v180
    %v184 = vpop.permute.xlu0 %183
    %v186 = vperm.slane %v184, 0
    %v188 = vsel %vm133, %v179, 0
    %190 = vmatpush.msra.mxu0 0.0
    %191 = vmatpush.msra.mxu0 0.0
    %192 = vmatpush.msra.mxu0 0.0
    %193 = vmatpush.msra.mxu0 0.0
    %194 = vmatpush.msra.mxu0 0.0
    %195 = vmatpush.msra.mxu0 0.0
    %196 = vmatpush.msra.mxu0 0.0
    %197 = vmatpush.msra.mxu0 0.0
    %198 = vmatpush.msra.mxu0 0.0
    %199 = vmatpush.msra.mxu0 0.0
    %200 = vmatpush.msra.mxu0 0.0
    %201 = vmatpush.msra.mxu0 0.0
    %202 = vmatpush.msra.mxu0 %v178
    %203 = vmatpush.msra.mxu0 %v177
    %204 = vmatpush.msra.mxu0 %v176
    %205 = vmatpush.msra.mxu0 %v175
    %206 = vmatmul.f32.gmra.mxu0 %v188
    %v207 = vpop.f32.mrf.mxu0
    %v208 = vadd.f32 %v186, %v207
    %209 = vdwg.mxu0
    %210 = vst [vmem:[#allocation3] sm:$0x1] %v208
    // Predicated region
    $region30: #{tpu_custom_call.1} parent=1 // pred_check
      _
    $region31: #{tpu_custom_call.1} parent=1 // pred_check_branch
      %212 = sbr.rel (0) target = $region33
    $region32: #{tpu_custom_call.1} parent=1 // pred_region
      %214 = vsyncadd [#allocation4], 0
      %s216 = sshll.u32 [#allocation3], 4
      %s217 = int_to_ptr.vmem [resolvable:$true] %s216
      %s218 = sshll.u32 %s7, 4
      %s219 = int_to_ptr.hbm [resolvable:$true] %s218
      %221 = dma.vmem_to_hbm [thread:$0]  %s217, 16, %s219, [#allocation4]
    $region33: #{tpu_custom_call.1} parent=1 // pred_fallthru
      _
    // Predicated region
    $region34: #{tpu_custom_call.1} parent=1 // pred_check
      _
    $region35: #{tpu_custom_call.1} parent=1 // pred_check_branch
      %223 = sbr.rel (0) target = $region37
    $region36: #{tpu_custom_call.1} parent=1 // pred_region
      %225 = dma.done [#allocation4], 16
    $region37: #{tpu_custom_call.1} parent=1 // pred_fallthru
      _
    %226 = vsyncpa [#allocation4], 1

</llo_original>
